<compile_context>
chip_gen: v7x
topology: tpu7x:2x2x1
jax: 0.10.0
libtpu: 0.0.40
codegen_flags: <defaults>
</compile_context>

<pallas_src>
import math

import jax
import jax.numpy as jnp
from jax.experimental import pallas as pl
from jax.experimental.pallas import tpu as pltpu


def _round_up(v, m):
    return ((v + m - 1) // m) * m


def _round_down(v, m):
    return (v // m) * m


def _linear_kernel(x_ref, wt_ref, b_ref, o_ref):
    # hidden = x @ W^T + b ; wt_ref holds the pre-transposed (Fin, Fout) weight tile,
    # so this is a standard [M,K]x[K,N] MXU contraction with f32 accumulation.
    h = jnp.dot(x_ref[...], wt_ref[...], preferred_element_type=jnp.float32)
    o_ref[...] = (h + b_ref[...]).astype(o_ref.dtype)


def _vmem_capacity_bytes():
    try:
        return int(pltpu.get_tpu_info().vmem_capacity_bytes)
    except Exception:
        return 64 << 20  # conservative fallback (v7x per-TensorCore VMEM)


def _pick_row_tile(n, bytes_per_row, avail_bytes, cap=512):
    """Largest multiple-of-8 row tile <= cap that fits `avail_bytes`."""
    fit = max(8, _round_down(max(avail_bytes, 0) // max(bytes_per_row, 1), 8))
    tm = min(cap, fit, _round_up(n, 8))
    # Keep at least two row tiles when N allows it so the 'parallel' axis can
    # shard across TensorCores (v7x megacore); costs nothing on 1-TC chips.
    tm = min(tm, max(8, _round_up(pl.cdiv(n, 2), 8)))
    return max(8, tm)


def gcn_layer_forward(x, adj, weight, bias, *, max_resident_weight_bytes=None):
    """Pallas implementation of GCN_Layer.forward.

    x:      (N, in_features)  float32
    adj:    (N, N)            float32   (unused: the module returns `hidden`)
    weight: (out_features, in_features)
    bias:   (out_features,)
    returns hidden = x @ weight^T + bias, shape (N, out_features)
    """
    del adj  # not used by the module's forward
    # TODO(synk): `self.dic(support)` has no definition in the PyTorch module (it would
    # raise AttributeError); the function returns `hidden`, so only the Linear is lowered.
    # `self.act` (ReLU) is likewise defined but never applied in forward.
    n, fin = x.shape
    fout, fin_w = weight.shape
    assert fin_w == fin
    itemsize = jnp.dtype(x.dtype).itemsize

    vmem_cap = _vmem_capacity_bytes()
    vmem_budget = (vmem_cap * 3) // 4            # leave headroom for compiler scratch
    if max_resident_weight_bytes is None:
        max_resident_weight_bytes = vmem_budget // 2

    # One-time, parameter-side transpose (constant-foldable under jit with fixed params)
    # so the MXU sees the stationary operand as [K, N]: no per-step XLU relayout.
    w_t = weight.T                               # (Fin, Fout)
    b2d = bias.reshape(1, fout).astype(jnp.float32)
    weight_bytes = fin * fout * itemsize

    cost = pl.CostEstimate(
        flops=2 * n * fin * fout,
        bytes_accessed=itemsize * (n * fin + fin * fout + fout + n * fout),
        transcendentals=0,
    )

    if weight_bytes <= max_resident_weight_bytes:
        # ---- Path A: weight fully resident (single-buffered), stream row tiles. ----
        avail = vmem_budget - weight_bytes - 4 * fout * itemsize
        tm = _pick_row_tile(n, 2 * (fin + fout) * itemsize, avail)
        grid = (pl.cdiv(n, tm),)

        return pl.pallas_call(
            _linear_kernel,
            out_shape=jax.ShapeDtypeStruct((n, fout), x.dtype),
            grid_spec=pltpu.PrefetchScalarGridSpec(
                num_scalar_prefetch=0,
                grid=grid,
                in_specs=[
                    pl.BlockSpec((tm, fin), lambda i: (i, 0)),          # streamed x rows
                    pl.BlockSpec((fin, fout), lambda i: (0, 0),
                                 pipeline_mode=pl.Buffered(1)),         # resident W^T (x1 buffer)
                    pl.BlockSpec((1, fout), lambda i: (0, 0),
                                 pipeline_mode=pl.Buffered(1)),         # resident bias row
                ],
                out_specs=pl.BlockSpec((tm, fout), lambda i: (i, 0)),
            ),
            compiler_params=pltpu.CompilerParams(
                dimension_semantics=("parallel",),       # shard N tiles across TensorCores
                vmem_limit_bytes=int(vmem_budget),
            ),
            cost_estimate=cost,
        )(x, w_t, b2d)

    # ---- Path B: weight too large to hold resident -> tile Fout as a 2nd grid axis. ----
    tn = 256 if fout >= 256 else 128
    fout_pad = _round_up(fout, tn)
    if fout_pad != fout:
        # Parameter-side pads only (tiny, constant-foldable); x is never copied.
        w_t = jnp.pad(w_t, ((0, 0), (0, fout_pad - fout)))
        b2d = jnp.pad(b2d, ((0, 0), (0, fout_pad - fout)))

    avail = vmem_budget - 2 * fin * tn * itemsize - 4 * tn * itemsize
    tm = _pick_row_tile(n, 2 * (fin + tn) * itemsize, avail)
    grid = (pl.cdiv(n, tm), fout_pad // tn)

    out = pl.pallas_call(
        _linear_kernel,
        out_shape=jax.ShapeDtypeStruct((n, fout_pad), x.dtype),
        grid_spec=pltpu.PrefetchScalarGridSpec(
            num_scalar_prefetch=0,
            grid=grid,
            in_specs=[
                pl.BlockSpec((tm, fin), lambda i, j: (i, 0)),   # x tile (reused across j)
                pl.BlockSpec((fin, tn), lambda i, j: (0, j)),   # streamed weight columns
                pl.BlockSpec((1, tn), lambda i, j: (0, j)),     # matching bias slice
            ],
            out_specs=pl.BlockSpec((tm, tn), lambda i, j: (i, j)),
        ),
        compiler_params=pltpu.CompilerParams(
            dimension_semantics=("parallel", "parallel"),
            vmem_limit_bytes=int(vmem_budget),
        ),
        cost_estimate=cost,
    )(x, w_t, b2d)

    return out if fout_pad == fout else out[:, :fout]


if __name__ == "__main__":
    def make_inputs(key, n, fin, fout):
        kx, kadj, kw, kb = jax.random.split(key, 4)
        x = jax.random.normal(kx, (n, fin), dtype=jnp.float32)
        adj = jax.random.normal(kadj, (n, n), dtype=jnp.float32)
        bound = 1.0 / math.sqrt(fin)   # nn.Linear default init range
        weight = jax.random.uniform(kw, (fout, fin), jnp.float32, -bound, bound)
        bias = jax.random.uniform(kb, (fout,), jnp.float32, -bound, bound)
        return x, adj, weight, bias

    # 1) Module-consistent small shapes (weight-resident path).
    x, adj, w, b = make_inputs(jax.random.PRNGKey(0), 8, 32, 16)
    out = jax.block_until_ready(gcn_layer_forward(x, adj, w, b))
    ref = x @ w.T + b
    assert out.shape == ref.shape
    assert jnp.allclose(out, ref, atol=1e-5, rtol=1e-5)

    # 2) Ragged N (grid tail block masked; no host-side padding of x, no output slice).
    x2, adj2, w2, b2 = make_inputs(jax.random.PRNGKey(1), 20, 32, 16)
    out2 = jax.block_until_ready(gcn_layer_forward(x2, adj2, w2, b2))
    ref2 = x2 @ w2.T + b2
    assert jnp.allclose(out2, ref2, atol=1e-5, rtol=1e-5)

    # 3) Fout-tiled path (forced via a tiny resident-weight budget), ragged Fout and N.
    x3, adj3, w3, b3 = make_inputs(jax.random.PRNGKey(2), 24, 48, 300)
    out3 = jax.block_until_ready(
        gcn_layer_forward(x3, adj3, w3, b3, max_resident_weight_bytes=1024))
    ref3 = x3 @ w3.T + b3
    assert out3.shape == ref3.shape
    assert jnp.allclose(out3, ref3, atol=1e-4, rtol=1e-4)

    print("KERNEL_OK")
</pallas_src>

<mosaic_0001>
module attributes {stable_mosaic.version = 11 : i64} {
  func.func @_linear_kernel(%arg0: i32, %arg1: memref<8x32xf32, #tpu.memory_space<vmem>>, %arg2: memref<32x16xf32, #tpu.memory_space<vmem>>, %arg3: memref<1x16xf32, #tpu.memory_space<vmem>>, %arg4: memref<8x16xf32, #tpu.memory_space<vmem>>) attributes {dimension_semantics = [#tpu.dimension_semantics<parallel>], iteration_bounds = array<i64: 1>, scalar_prefetch = 0 : i64, scratch_operands = 0 : i64, tpu.core_type = #tpu.core_type<tc>, window_params = [{transform_indices = @transform_0, window_bounds = array<i64: 8, 32>}, {pipeline_mode = #tpu.pipeline_mode<synchronous>, transform_indices = @transform_1, window_bounds = array<i64: 32, 16>}, {pipeline_mode = #tpu.pipeline_mode<synchronous>, transform_indices = @transform_2, window_bounds = array<i64: 1, 16>}, {transform_indices = @transform_3, window_bounds = array<i64: 8, 16>}]} {
    %c0 = arith.constant 0 : index
    %c0_0 = arith.constant 0 : index
    %0 = vector.load %arg1[%c0, %c0_0] : memref<8x32xf32, #tpu.memory_space<vmem>>, vector<8x32xf32>
    %c0_1 = arith.constant 0 : index
    %c0_2 = arith.constant 0 : index
    %1 = vector.load %arg2[%c0_1, %c0_2] : memref<32x16xf32, #tpu.memory_space<vmem>>, vector<32x16xf32>
    %cst = arith.constant dense<0.000000e+00> : vector<8x16xf32>
    %2 = tpu.matmul %0, %1, %cst {dimension_numbers = #tpu.dot_dimension_numbers<[1], [0], [0], [1], [0, 0, 1, 1], [], []>} : vector<8x32xf32>, vector<32x16xf32>, vector<8x16xf32> -> vector<8x16xf32>
    %c0_3 = arith.constant 0 : index
    %c0_4 = arith.constant 0 : index
    %3 = vector.load %arg3[%c0_3, %c0_4] : memref<1x16xf32, #tpu.memory_space<vmem>>, vector<1x16xf32>
    %4 = vector.broadcast %3 : vector<1x16xf32> to vector<8x16xf32>
    %5 = arith.addf %2, %4 : vector<8x16xf32>
    %c0_5 = arith.constant 0 : index
    %c0_6 = arith.constant 0 : index
    %6 = vector.load %arg4[%c0_5, %c0_6] : memref<8x16xf32, #tpu.memory_space<vmem>>, vector<8x16xf32>
    tpu.vector_store %arg4[%c0_5, %c0_6], %5 {strides = array<i32>} : memref<8x16xf32, #tpu.memory_space<vmem>>, vector<8x16xf32>,
    return
  }
  func.func @transform_0(%arg0: i32) -> (i32, i32) {
    %c0_i32 = arith.constant 0 : i32
    %c0_i32_0 = arith.constant 0 : i32
    return %arg0, %c0_i32 : i32, i32
  }
  func.func @transform_1(%arg0: i32) -> (i32, i32) {
    %c0_i32 = arith.constant 0 : i32
    %c0_i32_0 = arith.constant 0 : i32
    %c0_i32_1 = arith.constant 0 : i32
    return %c0_i32, %c0_i32_0 : i32, i32
  }
  func.func @transform_2(%arg0: i32) -> (i32, i32) {
    %c0_i32 = arith.constant 0 : i32
    %c0_i32_0 = arith.constant 0 : i32
    %c0_i32_1 = arith.constant 0 : i32
    return %c0_i32, %c0_i32_0 : i32, i32
  }
  func.func @transform_3(%arg0: i32) -> (i32, i32) {
    %c0_i32 = arith.constant 0 : i32
    %c0_i32_0 = arith.constant 0 : i32
    return %arg0, %c0_i32 : i32, i32
  }
}

</mosaic_0001>

<llo_original>
// kernel: tpu_custom_call.1
$region0: #{tpu_custom_call.1}
  #allocation0 [shape = 'u32[]', space=smem, size = 0x4, offset = 0x4, fixed_abs, tag = 'smem constant byte address 0x4 - core index']
  #allocation1 [shape = 'u32[144,128]{1,0:T(1,128)}', space=vmem, size = 0x12000, scoped, tag = 'internal scratch']
  %s0 = inlined_call_operand.vmem [shape: f32[8,32], index: 0, kind: input, shape index: {}]
  %s1 = inlined_call_operand.vmem [shape: f32[32,16], index: 1, kind: input, shape index: {}]
  %s2 = inlined_call_operand.vmem [shape: f32[1,16], index: 2, kind: input, shape index: {}]
  %s3 = inlined_call_operand.hbm [shape: f32[8,16], index: 3, kind: output, shape index: {}]
  %s4 = sld [smem:[#allocation0]]
  $region22: #{tpu_custom_call.1} parent=0
    _
  %s6 = ssub.s32 1, %s4
  %s7 = scalar_select 0, %s6, %s4
  $region1: #{tpu_custom_call.1} parent=0
    #allocation2 [shape = 'u8[4096]{0}', space=vmem, size = 0x1000, scoped, tag = 'output window, operand 0, single buffered']
    #allocation3 [shape = 's32[1]{0}', space=sflag, size = 0x4, scoped, tag = 'scoped memory for tpu_custom_call.1']
    %8 = vsyncpa [#allocation3], 0
    // Predicated region
    $region2: #{tpu_custom_call.1} parent=1 // pred_check
      _
    $region3: #{tpu_custom_call.1} parent=1 // pred_check_branch
      %10 = sbr.rel (0) target = $region5
    $region4: #{tpu_custom_call.1} parent=1 // pred_region
      _
    $region5: #{tpu_custom_call.1} parent=1 // pred_fallthru
      _
    // Predicated region
    $region6: #{tpu_custom_call.1} parent=1 // pred_check
      _
    $region7: #{tpu_custom_call.1} parent=1 // pred_check_branch
      %12 = sbr.rel (0) target = $region9
    $region8: #{tpu_custom_call.1} parent=1 // pred_region
      _
    $region9: #{tpu_custom_call.1} parent=1 // pred_fallthru
      _
    // Predicated region
    $region10: #{tpu_custom_call.1} parent=1 // pred_check
      _
    $region11: #{tpu_custom_call.1} parent=1 // pred_check_branch
      %14 = sbr.rel (0) target = $region13
    $region12: #{tpu_custom_call.1} parent=1 // pred_region
      _
    $region13: #{tpu_custom_call.1} parent=1 // pred_fallthru
      _
    %v15 = vld [vmem:[%s0] sm:$0xff]
    %v16 = vld [vmem:[%s1] sm:$0xff]
    %v17 = vld [vmem:[%s1 + $0x8] sm:$0xff]
    %v18 = vld [vmem:[%s1 + $0x10] sm:$0xff]
    %v19 = vld [vmem:[%s1 + $0x18] sm:$0xff]
    %v20 = vld [vmem:[%s2] sm:$0x1]
    %v22 = vlaneseq
    %v23 = vshrl.u32 %v22, 7
    %v24 = vsub.s32 0, %v23
    %v25 = vrot.slane %v20, %v24
    %vm27 = vcmask 261120
    %v29 = vsel %vm27, %v15, 0
    %31 = vmatprep.subr.mxu0 0.0
    %32 = vmatpush1.msra.mxu0 %v16
    %33 = vmatprep.subr.mxu0 0.0
    %34 = vmatpush1.msra.mxu0 %v17
    %35 = vmatprep.subr.mxu0 0.0
    %36 = vmatpush1.msra.mxu0 %v18
    %37 = vmatprep.subr.mxu0 0.0
    %38 = vmatpush1.msra.mxu0 %v19
    %39 = vmatprep.subr.mxu0 0.0
    %40 = vmatpush1.msra.mxu0 0.0
    %41 = vmatprep.subr.mxu0 0.0
    %42 = vmatpush1.msra.mxu0 0.0
    %43 = vmatprep.subr.mxu0 0.0
    %44 = vmatpush1.msra.mxu0 0.0
    %45 = vmatprep.subr.mxu0 0.0
    %46 = vmatpush1.msra.mxu0 0.0
    %47 = vmatprep.subr.mxu0 0.0
    %48 = vmatpush1.msra.mxu0 0.0
    %49 = vmatprep.subr.mxu0 0.0
    %50 = vmatpush1.msra.mxu0 0.0
    %51 = vmatprep.subr.mxu0 0.0
    %52 = vmatpush1.msra.mxu0 0.0
    %53 = vmatprep.subr.mxu0 0.0
    %54 = vmatpush1.msra.mxu0 0.0
    %55 = vmatprep.subr.mxu0 0.0
    %56 = vmatpush1.msra.mxu0 0.0
    %57 = vmatprep.subr.mxu0 0.0
    %58 = vmatpush1.msra.mxu0 0.0
    %59 = vmatprep.subr.mxu0 0.0
    %60 = vmatpush1.msra.mxu0 0.0
    %61 = vmatprep.subr.mxu0 0.0
    %62 = vmatpush1.msra.mxu0 0.0
    %63 = vmatprep.subr.mxu0 0.0
    %64 = vmatpush1.msra.mxu0 0.0
    %65 = vmatprep.subr.mxu0 0.0
    %66 = vmatpush1.msra.mxu0 0.0
    %67 = vmatprep.subr.mxu0 0.0
    %68 = vmatpush1.msra.mxu0 0.0
    %69 = vmatprep.subr.mxu0 0.0
    %70 = vmatpush1.msra.mxu0 0.0
    %71 = vmatprep.subr.mxu0 0.0
    %72 = vmatpush1.msra.mxu0 0.0
    %73 = vmatprep.subr.mxu0 0.0
    %74 = vmatpush1.msra.mxu0 0.0
    %75 = vmatprep.subr.mxu0 0.0
    %76 = vmatpush1.msra.mxu0 0.0
    %77 = vmatprep.subr.mxu0 0.0
    %78 = vmatpush1.msra.mxu0 0.0
    %79 = vmatprep.subr.mxu0 0.0
    %80 = vmatpush1.msra.mxu0 0.0
    %81 = vmatprep.subr.mxu0 0.0
    %82 = vmatpush1.msra.mxu0 0.0
    %83 = vmatprep.subr.mxu0 0.0
    %84 = vmatpush1.msra.mxu0 0.0
    %85 = vmatprep.subr.mxu0 0.0
    %86 = vmatpush1.msra.mxu0 0.0
    %87 = vmatprep.subr.mxu0 0.0
    %88 = vmatpush1.msra.mxu0 0.0
    %89 = vmatprep.subr.mxu0 0.0
    %90 = vmatpush1.msra.mxu0 0.0
    %91 = vmatprep.subr.mxu0 0.0
    %92 = vmatpush1.msra.mxu0 0.0
    %93 = vmatprep.subr.mxu0 0.0
    %94 = vmatpush1.msra.mxu0 0.0
    %95 = vmatprep.mubr.f32.mxu0 0.0
    %96 = vmatmul.mubr.f32.gmra.mrb[0].mxu0 %v29
    %v97 = vpop.f32.mrb[0].mxu0
    %v98 = vadd.f32 %v25, %v97
    %v99 = vpop.f32.mrb[0].mxu0
    %100 = vdwg.mxu0
    %vm101 = vcmask 130048
    %102 = vst.msk [vmem:[#allocation2] sm:$0xff] %vm101, %v98
    // Predicated region
    $region14: #{tpu_custom_call.1} parent=1 // pred_check
      _
    $region15: #{tpu_custom_call.1} parent=1 // pred_check_branch
      %104 = sbr.rel (0) target = $region17
    $region16: #{tpu_custom_call.1} parent=1 // pred_region
      %s106 = ssub.s32 128, 128
      %107 = vsyncadd [#allocation3], %s106
      %s109 = sshll.u32 [#allocation2], 4
      %s110 = int_to_ptr.vmem [resolvable:$true] %s109
      %112 = dma.vmem_to_hbm [thread:$0]  %s110, 128, %s3, [#allocation3]
    $region17: #{tpu_custom_call.1} parent=1 // pred_fallthru
      _
    // Predicated region
    $region18: #{tpu_custom_call.1} parent=1 // pred_check
      _
    $region19: #{tpu_custom_call.1} parent=1 // pred_check_branch
      %114 = sbr.rel (0) target = $region21
    $region20: #{tpu_custom_call.1} parent=1 // pred_region
      %115 = dma.done [#allocation3], 128
    $region21: #{tpu_custom_call.1} parent=1 // pred_fallthru
      _
    %116 = vsyncpa [#allocation3], 1

</llo_original>
